<compile_context>
chip_gen: v7x
topology: tpu7x:2x2x1
jax: 0.10.0
libtpu: 0.0.40
codegen_flags: <defaults>
</compile_context>

<pallas_src>
import functools

import numpy as np
import jax
import jax.numpy as jnp
from jax.experimental import pallas as pl
from jax.experimental.pallas import tpu as pltpu

_VMEM_LIMIT = 40 * 1024 * 1024   # > v5e(16MiB)/v6e(32MiB) scoped defaults, < v7x 64MiB physical


def _ceil_to(x, m):
    return ((x + m - 1) // m) * m


# ----------------------------------------------------------------------------- #
# pltpu.roll direction probe (run once, eagerly, before any jit).
# ----------------------------------------------------------------------------- #
_ROLL_LIKE_JNP = None


def _roll_like_jnp():
    """True iff pltpu.roll(x, s, axis) matches jnp.roll (result[i] = x[i - s])."""
    global _ROLL_LIKE_JNP
    if _ROLL_LIKE_JNP is None:
        def k(x_ref, o_ref):
            o_ref[...] = pltpu.roll(x_ref[...], 1, axis=1)

        x = jnp.broadcast_to(jnp.arange(128, dtype=jnp.float32)[None, :], (8, 128))
        out = pl.pallas_call(
            k, out_shape=jax.ShapeDtypeStruct((8, 128), jnp.float32))(x)
        _ROLL_LIKE_JNP = bool(np.asarray(out)[0, 0] == 127.0)
    return _ROLL_LIKE_JNP


def _shift_cols(v, t0, sp, roll_like):
    """result[:, s] = v[:, (s + t0) mod sp]   (left shift by t0 lanes, t0 may be < 0)."""
    t0m = t0 % sp
    if t0m == 0:
        return v
    amt = (sp - t0m) % sp if roll_like else t0m
    return pltpu.roll(v, amt, axis=1)


# ----------------------------------------------------------------------------- #
# Slab layout helpers (XLA side).
#   slab[:, :, s] with s = y_p * Wp + x_p, Wp = W + 2; valid image at
#   y_p in [1, H+1), x_p in [1, W+1); all other columns (halo + round-up) are 0.
# ----------------------------------------------------------------------------- #
def nchw_to_slab(x):
    n, c, h, w = x.shape
    hp, wp = h + 2, w + 2
    xp = jnp.pad(x, ((0, 0), (0, 0), (1, 1), (1, 1)))
    flat = xp.reshape(n, c, hp * wp)
    sp = _ceil_to(hp * wp, 128)
    if sp > hp * wp:
        flat = jnp.pad(flat, ((0, 0), (0, 0), (0, sp - hp * wp)))
    return flat


def slab_to_nchw(slab, h, w):
    n, c, _ = slab.shape
    hp, wp = h + 2, w + 2
    return slab[:, :, :hp * wp].reshape(n, c, hp, wp)[:, :, 1:h + 1, 1:w + 1]


def _halo_mask(h, w, sp):
    wp = w + 2
    s = np.arange(sp)
    yy, xx = s // wp, s % wp
    valid = (yy >= 1) & (yy <= h) & (xx >= 1) & (xx <= w)
    return jnp.asarray(valid.astype(np.float32)[None, :])       # (1, sp) f32


def avg_pool2(x):  # NCHW, kernel = stride = 2
    n, c, h, w = x.shape
    return x.reshape(n, c, h // 2, 2, w // 2, 2).mean(axis=(3, 5))


# ----------------------------------------------------------------------------- #
# Pallas kernels
# ----------------------------------------------------------------------------- #
def _block_kernel(*refs, cin, cout, wp, sp, pre_relu1, has_sc, roll_like):
    """One full residual block on one image, entirely in VMEM.

    x slab (cin, sp) bf16 (zero halo, centred valid region)
      -> [relu] -> conv1 (stacked K=9*cin matmul) + b1 -> relu -> mask
      -> conv2 (stacked K=9*cout matmul) + b2
      -> + shortcut (1x1 conv of raw x, or identity)
      -> mask -> out slab (cout, sp) bf16   (same layout; pooling done outside).
    """
    if has_sc:
        (x_ref, m_ref, w1_ref, b1_ref, w2_ref, b2_ref, wsc_ref, bsc_ref,
         o_ref, stk1, stk2) = refs
    else:
        (x_ref, m_ref, w1_ref, b1_ref, w2_ref, b2_ref,
         o_ref, stk1, stk2) = refs
        wsc_ref = bsc_ref = None

    x = x_ref[0]                                   # (cin, sp) bf16
    mask = m_ref[...]                              # (1, sp)  f32

    xr = jnp.maximum(x, 0) if pre_relu1 else x     # bf16 relu (halo stays 0)

    def build_stack(src, stk, c):
        # stacked[(dy*3+dx)*c + ci, s] = src[ci, s + (dy-1)*wp + (dx-1)]
        # source column for every valid output stays inside [0, Hp*Wp), so the
        # roll wraparound only pollutes halo columns (masked to 0 later).
        for dy in range(3):
            for dx in range(3):
                t0 = (dy - 1) * wp + (dx - 1)
                stk[pl.ds((dy * 3 + dx) * c, c), :] = _shift_cols(src, t0, sp, roll_like)

    # conv1: one matmul with K = 9 * cin
    build_stack(xr, stk1, cin)
    h1 = jnp.dot(w1_ref[...], stk1[...], preferred_element_type=jnp.float32)
    h1 = jnp.maximum(h1 + b1_ref[...], 0.0) * mask            # relu + re-zero halo
    h1b = h1.astype(jnp.bfloat16)

    # conv2: one matmul with K = 9 * cout
    build_stack(h1b, stk2, cout)
    h2 = jnp.dot(w2_ref[...], stk2[...], preferred_element_type=jnp.float32)
    h2 = h2 + b2_ref[...]

    # shortcut (uses the raw, non-relu'd input slab)
    if has_sc:
        sc = jnp.dot(wsc_ref[...], x, preferred_element_type=jnp.float32) + bsc_ref[...]
    else:
        sc = x.astype(jnp.float32)

    o_ref[0] = ((h2 + sc) * mask).astype(o_ref.dtype)


def _head_kernel(x_ref, w_ref, b_ref, e_ref, o_ref):
    """out = l(w) . sum_s relu(x) + b + emb . sum_s relu(x)   (halo columns are 0)."""
    x = jnp.maximum(x_ref[...].astype(jnp.float32), 0.0)       # (M, C, Sp)
    feat = jnp.sum(x, axis=2)                                  # (M, C)
    lin = jnp.sum(feat * w_ref[...], axis=1, keepdims=True)    # (M, 1)
    proj = jnp.sum(e_ref[...] * feat, axis=1, keepdims=True)   # (M, 1)
    o_ref[...] = lin + proj + b_ref[...]


# ----------------------------------------------------------------------------- #
# Pallas wrappers
# ----------------------------------------------------------------------------- #
def fused_block(p, x_slab, h, w, *, pre_relu1, downsample):
    """One residual/optimized block.  Input/output are zero-halo slabs (N, C, Sp).

    For downsample blocks, pool(conv2(...) + shortcut) == pooled PyTorch result
    because avg_pool commutes with the residual add and with the 1x1 conv.
    """
    n, cin, sp = x_slab.shape
    wp = w + 2
    cout, k9 = p["w1"].shape
    assert k9 == 9 * cin, (k9, cin)
    has_sc = "wsc" in p
    mask = _halo_mask(h, w, sp)

    kern = functools.partial(
        _block_kernel, cin=cin, cout=cout, wp=wp, sp=sp,
        pre_relu1=pre_relu1, has_sc=has_sc, roll_like=_roll_like_jnp())

    in_specs = [
        pl.BlockSpec((1, cin, sp), lambda i: (i, 0, 0)),
        pl.BlockSpec((1, sp), lambda i: (0, 0)),
        pl.BlockSpec((cout, 9 * cin), lambda i: (0, 0)),        # weights: VMEM resident
        pl.BlockSpec((cout, 1), lambda i: (0, 0)),
        pl.BlockSpec((cout, 9 * cout), lambda i: (0, 0)),
        pl.BlockSpec((cout, 1), lambda i: (0, 0)),
    ]
    args = [x_slab, mask, p["w1"], p["b1"], p["w2"], p["b2"]]
    if has_sc:
        in_specs += [pl.BlockSpec((cout, cin), lambda i: (0, 0)),
                     pl.BlockSpec((cout, 1), lambda i: (0, 0))]
        args += [p["wsc"], p["bsc"]]

    out_slab = pl.pallas_call(
        kern,
        out_shape=jax.ShapeDtypeStruct((n, cout, sp), jnp.bfloat16),
        grid_spec=pltpu.PrefetchScalarGridSpec(
            num_scalar_prefetch=0,
            grid=(n,),
            in_specs=in_specs,
            out_specs=pl.BlockSpec((1, cout, sp), lambda i: (i, 0, 0)),
            scratch_shapes=[pltpu.VMEM((9 * cin, sp), jnp.bfloat16),
                            pltpu.VMEM((9 * cout, sp), jnp.bfloat16)]),
        compiler_params=pltpu.CompilerParams(
            dimension_semantics=("parallel",),
            vmem_limit_bytes=_VMEM_LIMIT),
    )(*args)

    if not downsample:
        return out_slab, h, w
    # TODO(synk): avg_pool + slab re-layout still one XLA pass per downsample block.
    img = slab_to_nchw(out_slab, h, w).astype(jnp.float32)
    pooled = avg_pool2(img).astype(jnp.bfloat16)
    return nchw_to_slab(pooled), h // 2, w // 2


def head_pallas(x_slab, lin, emb=None):
    """Fused ReLU -> global spatial sum -> linear head (+ embedding projection)."""
    m, c, sp = x_slab.shape
    if emb is None:
        emb = jnp.zeros((m, c), jnp.float32)
    return pl.pallas_call(
        _head_kernel,
        out_shape=jax.ShapeDtypeStruct((m, 1), jnp.float32),
        grid_spec=pltpu.PrefetchScalarGridSpec(
            num_scalar_prefetch=0,
            grid=(1,),
            in_specs=[
                pl.BlockSpec((m, c, sp), lambda i: (0, 0, 0)),
                pl.BlockSpec((1, c), lambda i: (0, 0)),
                pl.BlockSpec((1, 1), lambda i: (0, 0)),
                pl.BlockSpec((m, c), lambda i: (0, 0)),
            ],
            out_specs=pl.BlockSpec((m, 1), lambda i: (0, 0))),
        compiler_params=pltpu.CompilerParams(
            dimension_semantics=("arbitrary",),
            vmem_limit_bytes=_VMEM_LIMIT),
    )(x_slab, lin["w"], lin["b"], emb.astype(jnp.float32))


# ----------------------------------------------------------------------------- #
# On-device RoIAlign (torchvision semantics, aligned=False, sampling_ratio=0)
# ----------------------------------------------------------------------------- #
def roi_align_jax(feat, rois, spatial_scale, out_size=8, max_grid=4):
    n, c, hf, wf = feat.shape
    r = rois.shape[0]
    bidx = rois[:, 0].astype(jnp.int32)
    x1 = rois[:, 1] * spatial_scale
    y1 = rois[:, 2] * spatial_scale
    x2 = rois[:, 3] * spatial_scale
    y2 = rois[:, 4] * spatial_scale
    roi_w = jnp.maximum(x2 - x1, 1.0)
    roi_h = jnp.maximum(y2 - y1, 1.0)
    bin_w = roi_w / out_size
    bin_h = roi_h / out_size
    gh = jnp.clip(jnp.ceil(roi_h / out_size), 1, max_grid)
    gw = jnp.clip(jnp.ceil(roi_w / out_size), 1, max_grid)
    count = gh * gw

    pidx = jnp.arange(out_size, dtype=jnp.float32)
    gidx = jnp.arange(max_grid, dtype=jnp.float32)

    yy = (y1[:, None, None] + pidx[None, :, None] * bin_h[:, None, None]
          + (gidx[None, None, :] + 0.5) * bin_h[:, None, None] / gh[:, None, None])
    xx = (x1[:, None, None] + pidx[None, :, None] * bin_w[:, None, None]
          + (gidx[None, None, :] + 0.5) * bin_w[:, None, None] / gw[:, None, None])
    vy = gidx[None, :] < gh[:, None]
    vx = gidx[None, :] < gw[:, None]

    def prep(v, size):
        oob = (v < -1.0) | (v > size)
        v = jnp.maximum(v, 0.0)
        low0 = jnp.floor(v)
        top = low0 >= size - 1
        low = jnp.where(top, float(size - 1), low0)
        high = jnp.where(top, float(size - 1), low0 + 1.0)
        frac = jnp.where(top, 0.0, v - low0)
        return low.astype(jnp.int32), high.astype(jnp.int32), frac, oob

    ylo, yhi, fy, ooby = prep(yy, hf)
    xlo, xhi, fx, oobx = prep(xx, wf)

    fg = feat[bidx].reshape(r, c, hf * wf)

    def gather(yi, xi):
        idx = yi[:, :, None, :, None] * wf + xi[:, None, :, None, :]
        flat = idx.reshape(r, 1, -1)
        vals = jnp.take_along_axis(
            fg, jnp.broadcast_to(flat, (r, c, flat.shape[-1])), axis=2)
        return vals.reshape(r, c, out_size, out_size, max_grid, max_grid)

    mask = ((~ooby[:, :, None, :, None]) & (~oobx[:, None, :, None, :])
            & vy[:, None, None, :, None] & vx[:, None, None, None, :])
    norm = mask.astype(jnp.float32) / count[:, None, None, None, None]
    hy = (1.0 - fy)[:, :, None, :, None]
    ly = fy[:, :, None, :, None]
    hx = (1.0 - fx)[:, None, :, None, :]
    lx = fx[:, None, :, None, :]

    out = (gather(ylo, xlo) * (hy * hx * norm)[:, None]
           + gather(ylo, xhi) * (hy * lx * norm)[:, None]
           + gather(yhi, xlo) * (ly * hx * norm)[:, None]
           + gather(yhi, xhi) * (ly * lx * norm)[:, None])
    return out.sum(axis=(4, 5))                                # (R, C, 8, 8)


# ----------------------------------------------------------------------------- #
# Parameter init (deterministic, spectral-normalized)
# TODO(synk): one power iteration from random u at init; a trained PyTorch
#             checkpoint's running-u sigma differs numerically.
# ----------------------------------------------------------------------------- #
def _l2norm(v, eps=1e-4):
    return v / jnp.maximum(jnp.linalg.norm(v), eps)


def spectral_normalize(w_mat, key, eps=1e-4):
    u = _l2norm(jax.random.normal(key, (w_mat.shape[0],), jnp.float32), eps)
    v = _l2norm(w_mat.T @ u, eps)
    u = _l2norm(w_mat @ v, eps)
    sigma = u @ (w_mat @ v)
    return w_mat / sigma


def init_conv3(key, cin, cout):
    kw_, kb, ku = jax.random.split(key, 3)
    w = jax.random.normal(kw_, (cout, cin, 3, 3), jnp.float32) / np.sqrt(cin * 9)
    w = spectral_normalize(w.reshape(cout, -1), ku).reshape(cout, cin, 3, 3)
    b = 0.01 * jax.random.normal(kb, (cout,), jnp.float32)
    cin_pad = _ceil_to(max(cin, 16), 16)                       # bf16 sublane tile
    if cin_pad != cin:
        w = jnp.pad(w, ((0, 0), (0, cin_pad - cin), (0, 0), (0, 0)))
    # stacked-K layout: w2d[co, (dy*3+dx)*cin + ci] = w[co, ci, dy, dx]
    w2d = jnp.transpose(w, (0, 2, 3, 1)).reshape(cout, 9 * cin_pad)
    return w2d.astype(jnp.bfloat16), b.reshape(cout, 1)


def init_conv1(key, cin, cout):
    kw_, kb, ku = jax.random.split(key, 3)
    w = jax.random.normal(kw_, (cout, cin), jnp.float32) / np.sqrt(cin)
    w = spectral_normalize(w, ku)
    b = 0.01 * jax.random.normal(kb, (cout,), jnp.float32)
    cin_pad = _ceil_to(max(cin, 16), 16)
    if cin_pad != cin:
        w = jnp.pad(w, ((0, 0), (0, cin_pad - cin)))
    return w.astype(jnp.bfloat16), b.reshape(cout, 1)


def init_linear(key, din, dout):
    kw_, kb, ku = jax.random.split(key, 3)
    w = jax.random.normal(kw_, (dout, din), jnp.float32) / np.sqrt(din)
    w = spectral_normalize(w, ku)
    b = 0.01 * jax.random.normal(kb, (dout,), jnp.float32)
    return {"w": w, "b": b.reshape(dout, 1)}


def init_embedding(key, num, dim):
    kw_, ku = jax.random.split(key)
    w = jax.random.normal(kw_, (num, dim), jnp.float32) / np.sqrt(dim)
    return spectral_normalize(w, ku)


def init_opt_block(key, cin, cout):
    k1, k2, k3 = jax.random.split(key, 3)
    w1, b1 = init_conv3(k1, cin, cout)
    w2, b2 = init_conv3(k2, cout, cout)
    wsc, bsc = init_conv1(k3, cin, cout)
    return {"w1": w1, "b1": b1, "w2": w2, "b2": b2, "wsc": wsc, "bsc": bsc}


def init_res_block(key, cin, cout, downsample):
    k1, k2, k3 = jax.random.split(key, 3)
    w1, b1 = init_conv3(k1, cin, cout)
    w2, b2 = init_conv3(k2, cout, cout)
    p = {"w1": w1, "b1": b1, "w2": w2, "b2": b2}
    if (cin != cout) or downsample:
        wsc, bsc = init_conv1(k3, cin, cout)
        p["wsc"] = wsc
        p["bsc"] = bsc
    return p


def init_params(key, ch=16, num_classes=81):
    ks = jax.random.split(key, 13)
    return {
        "block1": init_opt_block(ks[0], 3, ch),
        "block2": init_res_block(ks[1], ch, ch * 2, True),
        "block3": init_res_block(ks[2], ch * 2, ch * 4, True),
        "block4": init_res_block(ks[3], ch * 4, ch * 8, True),
        "block5": init_res_block(ks[4], ch * 8, ch * 8, True),
        "block6": init_res_block(ks[5], ch * 8, ch * 16, True),
        "block7": init_res_block(ks[6], ch * 16, ch * 16, False),
        "l8": init_linear(ks[7], ch * 16, 1),
        "block_obj4": init_res_block(ks[8], ch * 4, ch * 8, False),
        "block_obj5": init_res_block(ks[9], ch * 8, ch * 8, False),
        "block_obj6": init_res_block(ks[10], ch * 8, ch * 16, True),
        "l_obj": init_linear(ks[11], ch * 16, 1),
        "l_y": init_embedding(ks[12], num_classes, ch * 16),
    }


# ----------------------------------------------------------------------------- #
# ResnetDiscriminator256 + CombineDiscriminator256 forward
# ----------------------------------------------------------------------------- #
@jax.jit
def _device_forward(params, images, bbox, label):
    b, cimg, size, _ = images.shape
    o = bbox.shape[1]

    x = images.astype(jnp.bfloat16)
    cpad = _ceil_to(max(cimg, 16), 16) - cimg
    if cpad:
        x = jnp.pad(x, ((0, 0), (0, cpad), (0, 0), (0, 0)))
    h = w = size
    xs = nchw_to_slab(x)

    xs, h, w = fused_block(params["block1"], xs, h, w, pre_relu1=False, downsample=True)
    xs, h, w = fused_block(params["block2"], xs, h, w, pre_relu1=True, downsample=True)
    x1s, h1, w1 = fused_block(params["block3"], xs, h, w, pre_relu1=True, downsample=True)
    x2s, h2, w2 = fused_block(params["block4"], x1s, h1, w1, pre_relu1=True, downsample=True)
    xs, h, w = fused_block(params["block5"], x2s, h2, w2, pre_relu1=True, downsample=True)
    xs, h, w = fused_block(params["block6"], xs, h, w, pre_relu1=True, downsample=True)
    xs, h, w = fused_block(params["block7"], xs, h, w, pre_relu1=True, downsample=False)
    out_im = head_pallas(xs, params["l8"])                       # (B, 1)

    # ---- bbox preprocessing (CombineDiscriminator256.forward), static B*O rois --
    bb = bbox.astype(jnp.float32)
    x1b = bb[..., 0] * size
    y1b = bb[..., 1] * size
    x2b = (bb[..., 0] + bb[..., 2]) * size
    y2b = (bb[..., 1] + bb[..., 3]) * size
    batch_col = jnp.broadcast_to(jnp.arange(b, dtype=jnp.float32)[:, None], (b, o))
    rois = jnp.stack([batch_col, x1b, y1b, x2b, y2b], axis=-1).reshape(b * o, 5)
    labels = label.reshape(-1).astype(jnp.int32)
    is_small = ((x2b - x1b < 128.0) & (y2b - y1b < 128.0)).reshape(-1)

    # ---- object feature branches (always computed for all B*O rois) ------------
    fs, _, _ = fused_block(params["block_obj4"], x1s, h1, w1, pre_relu1=True, downsample=False)
    fs, _, _ = fused_block(params["block_obj5"], fs, h1, w1, pre_relu1=True, downsample=False)
    fl, _, _ = fused_block(params["block_obj5"], x2s, h2, w2, pre_relu1=True, downsample=False)

    feat_s = slab_to_nchw(fs, h1, w1).astype(jnp.float32)        # 1/8 map
    feat_l = slab_to_nchw(fl, h2, w2).astype(jnp.float32)        # 1/16 map
    pooled_s = roi_align_jax(feat_s, rois, 1.0 / 8.0)
    pooled_l = roi_align_jax(feat_l, rois, 1.0 / 16.0)
    obj = jnp.where(is_small[:, None, None, None], pooled_s, pooled_l)

    obj_slab = nchw_to_slab(obj.astype(jnp.bfloat16))            # (B*O, 8ch, Sp(10*10))
    obj_slab, _, _ = fused_block(params["block_obj6"], obj_slab, 8, 8,
                                 pre_relu1=True, downsample=True)
    emb = params["l_y"][labels]                                  # (B*O, 16ch)
    out_obj_all = head_pallas(obj_slab, params["l_obj"], emb=emb)
    return out_im, out_obj_all


def combine_discriminator_forward(params, images, bbox, label):
    """CombineDiscriminator256.forward.  Heavy compute is one jitted device graph
    with static (B*O)-roi shapes; only the final dynamically-sized row
    selection/ordering (label != 0, large-then-small) uses host indices."""
    _roll_like_jnp()
    size = float(images.shape[2])
    bb = np.asarray(bbox, np.float32)
    lab = np.asarray(label).reshape(-1)
    w_pix = bb[..., 2].reshape(-1) * size
    h_pix = bb[..., 3].reshape(-1) * size
    small = (w_pix < 128.0) & (h_pix < 128.0)
    valid = lab != 0
    order = np.concatenate([np.nonzero(valid & ~small)[0],
                            np.nonzero(valid & small)[0]]).astype(np.int32)

    out_im, out_obj_all = _device_forward(params, images, bbox, label)
    out_obj = out_obj_all[jnp.asarray(order)]
    return out_im, out_obj


# ----------------------------------------------------------------------------- #
if __name__ == "__main__":
    key = jax.random.PRNGKey(0)
    pkey, ikey = jax.random.split(key)

    ch = 16                # scaled-down channel multiplier (module default is 64)
    num_classes = 81
    B, Himg = 2, 128       # small image size consistent with the 6x-downsample net

    _roll_like_jnp()       # probe pltpu.roll direction once, outside the big jit

    params = init_params(pkey, ch=ch, num_classes=num_classes)
    images = jax.random.normal(ikey, (B, 3, Himg, Himg), jnp.float32)   # NCHW input
    bbox = jnp.array([[[0.10, 0.10, 0.30, 0.40],
                       [0.00, 0.00, 1.00, 1.00],     # full-size box -> "large" branch
                       [0.50, 0.50, 0.20, 0.20]],    # label 0 -> filtered out
                      [[0.20, 0.30, 0.25, 0.25],
                       [0.10, 0.20, 0.40, 0.50],
                       [0.30, 0.10, 0.20, 0.60]]], jnp.float32)
    label = jnp.array([[5, 12, 0], [7, 3, 20]], jnp.int32)

    d_out_img, d_out_obj = combine_discriminator_forward(params, images, bbox, label)
    jax.block_until_ready((d_out_img, d_out_obj))

    assert d_out_img.shape == (B, 1), d_out_img.shape
    assert d_out_obj.shape == (5, 1), d_out_obj.shape   # 5 rois with nonzero labels
    print("KERNEL_OK")
</pallas_src>

<mosaic_0001>
module attributes {stable_mosaic.version = 11 : i64} {
  func.func @k(%arg0: memref<8x128xf32, #tpu.memory_space<vmem>>, %arg1: memref<8x128xf32, #tpu.memory_space<vmem>>) attributes {dimension_semantics = [], scalar_prefetch = 0 : i64, scratch_operands = 0 : i64, tpu.core_type = #tpu.core_type<tc>} {
    %c0 = arith.constant 0 : index
    %c0_0 = arith.constant 0 : index
    %0 = vector.load %arg0[%c0, %c0_0] : memref<8x128xf32, #tpu.memory_space<vmem>>, vector<8x128xf32>
    %c1_i32 = arith.constant 1 : i32
    %1 = tpu.dynamic_rotate %0 by %c1_i32 dim 1 : vector<8x128xf32>, i32 -> vector<8x128xf32>
    %c0_1 = arith.constant 0 : index
    %c0_2 = arith.constant 0 : index
    %2 = vector.load %arg1[%c0_1, %c0_2] : memref<8x128xf32, #tpu.memory_space<vmem>>, vector<8x128xf32>
    tpu.vector_store %arg1[%c0_1, %c0_2], %1 {strides = array<i32>} : memref<8x128xf32, #tpu.memory_space<vmem>>, vector<8x128xf32>,
    return
  }
}

</mosaic_0001>

<llo_original>
// kernel: tpu_custom_call.1
$region0: #{tpu_custom_call.1}
  #allocation0 [shape = 'u32[]', space=smem, size = 0x4, offset = 0x4, fixed_abs, tag = 'smem constant byte address 0x4 - core index']
  #allocation1 [shape = 'u32[144,128]{1,0:T(1,128)}', space=vmem, size = 0x12000, scoped, tag = 'internal scratch']
  %s0 = inlined_call_operand.hbm [shape: f32[8,128], index: 0, kind: input, shape index: {}]
  %s1 = inlined_call_operand.hbm [shape: f32[8,128], index: 1, kind: output, shape index: {}]
  %s2 = sld [smem:[#allocation0]]
  $region18: #{tpu_custom_call.1} parent=0
    _
  %s4 = ssub.s32 1, %s2
  %s5 = scalar_select 0, %s4, %s2
  $region1: #{tpu_custom_call.1} parent=0
    #allocation2 [shape = 'u8[4096]{0}', space=vmem, size = 0x1000, scoped, tag = 'input window, operand 0, single buffered']
    #allocation3 [shape = 's32[1]{0}', space=sflag, size = 0x4, scoped, tag = 'scoped memory for tpu_custom_call.1']
    #allocation4 [shape = 's32[1]{0}', space=sflag, size = 0x4, scoped, tag = 'scoped memory for tpu_custom_call.1']
    #allocation5 [shape = 'u8[4096]{0}', space=vmem, size = 0x1000, scoped, tag = 'output window, operand 0, single buffered']
    %6 = vsyncpa [#allocation3], 0
    %7 = vsyncpa [#allocation4], 0
    // Predicated region
    $region2: #{tpu_custom_call.1} parent=1 // pred_check
      _
    $region3: #{tpu_custom_call.1} parent=1 // pred_check_branch
      %9 = sbr.rel (0) target = $region5
    $region4: #{tpu_custom_call.1} parent=1 // pred_region
      %s11 = ssub.s32 128, 128
      %12 = vsyncadd [#allocation3], %s11
      %s14 = sshll.u32 [#allocation2], 4
      %s15 = int_to_ptr.vmem [resolvable:$true] %s14
      %17 = dma.hbm_to_vmem [thread:$0]  %s0, 128, %s15, [#allocation3]
    $region5: #{tpu_custom_call.1} parent=1 // pred_fallthru
      _
    // Predicated region
    $region6: #{tpu_custom_call.1} parent=1 // pred_check
      _
    $region7: #{tpu_custom_call.1} parent=1 // pred_check_branch
      %19 = sbr.rel (0) target = $region9
    $region8: #{tpu_custom_call.1} parent=1 // pred_region
      %20 = dma.done [#allocation3], 128
    $region9: #{tpu_custom_call.1} parent=1 // pred_fallthru
      _
    %v21 = vld [vmem:[#allocation2] sm:$0xff]
    %22 = vrot.lane.b32.xlu0 %v21, 1
    %v23 = vpop.permute.xlu0 %22
    %24 = vst [vmem:[#allocation5] sm:$0xff] %v23
    // Predicated region
    $region10: #{tpu_custom_call.1} parent=1 // pred_check
      _
    $region11: #{tpu_custom_call.1} parent=1 // pred_check_branch
      %26 = sbr.rel (0) target = $region13
    $region12: #{tpu_custom_call.1} parent=1 // pred_region
      %s28 = ssub.s32 128, 128
      %29 = vsyncadd [#allocation4], %s28
      %s31 = sshll.u32 [#allocation5], 4
      %s32 = int_to_ptr.vmem [resolvable:$true] %s31
      %34 = dma.vmem_to_hbm [thread:$0]  %s32, 128, %s1, [#allocation4]
    $region13: #{tpu_custom_call.1} parent=1 // pred_fallthru
      _
    // Predicated region
    $region14: #{tpu_custom_call.1} parent=1 // pred_check
      _
    $region15: #{tpu_custom_call.1} parent=1 // pred_check_branch
      %36 = sbr.rel (0) target = $region17
    $region16: #{tpu_custom_call.1} parent=1 // pred_region
      %37 = dma.done [#allocation4], 128
    $region17: #{tpu_custom_call.1} parent=1 // pred_fallthru
      _
    %38 = vsyncpa [#allocation3], 1
    %39 = vsyncpa [#allocation4], 1

</llo_original>
